<compile_context>
chip_gen: v7x
topology: tpu7x:2x2x1
jax: 0.10.0
libtpu: 0.0.40
codegen_flags: <defaults>
</compile_context>

<pallas_src>
import functools

import jax
import jax.numpy as jnp
from jax.experimental import pallas as pl
from jax.experimental.pallas import tpu as pltpu

BN_EPS = 1e-5
NEG_BIG = -1e30
VMEM_LIMIT_BYTES = 32 * 1024 * 1024  # safe on v5e/v6e/v7x; tiles below use < ~8 MiB

_IMG_MEAN = jnp.array([0.485, 0.456, 0.406], jnp.float32)
_IMG_STD = jnp.array([0.229, 0.224, 0.225], jnp.float32)


def _round_up(x, m):
    return (x + m - 1) // m * m


# ----------------------------------------------------------------------------
# Pallas kernels
# ----------------------------------------------------------------------------
def _mm_single_kernel(a_ref, b_ref, s_ref, t_ref, o_ref, *, relu):
    """Single-K-block: out = maybe_relu((A @ B) * scale + bias)."""
    acc = jnp.dot(a_ref[...], b_ref[...], preferred_element_type=jnp.float32)
    out = acc * s_ref[...] + t_ref[...]
    if relu:
        out = jnp.maximum(out, 0.0)
    o_ref[...] = out.astype(o_ref.dtype)


def _mm_single_res_kernel(a_ref, b_ref, s_ref, t_ref, r_ref, o_ref, *, relu):
    """Single-K-block with fused residual add (bottleneck conv3 epilogue)."""
    acc = jnp.dot(a_ref[...], b_ref[...], preferred_element_type=jnp.float32)
    out = acc * s_ref[...] + t_ref[...] + r_ref[...].astype(jnp.float32)
    if relu:
        out = jnp.maximum(out, 0.0)
    o_ref[...] = out.astype(o_ref.dtype)


def _mm_kernel(a_ref, b_ref, s_ref, t_ref, o_ref, acc_ref, *, relu):
    """Multi-K-block accumulating matmul with scale/bias (+ReLU) epilogue."""
    k = pl.program_id(2)

    @pl.when(k == 0)
    def _():
        acc_ref[...] = jnp.zeros_like(acc_ref)

    acc_ref[...] += jnp.dot(a_ref[...], b_ref[...],
                            preferred_element_type=jnp.float32)

    @pl.when(k == pl.num_programs(2) - 1)
    def _():
        out = acc_ref[...] * s_ref[...] + t_ref[...]
        if relu:
            out = jnp.maximum(out, 0.0)
        o_ref[...] = out.astype(o_ref.dtype)


def _mm_res_kernel(a_ref, b_ref, s_ref, t_ref, r_ref, o_ref, acc_ref, *, relu):
    """Multi-K-block accumulating matmul with residual add epilogue."""
    k = pl.program_id(2)

    @pl.when(k == 0)
    def _():
        acc_ref[...] = jnp.zeros_like(acc_ref)

    acc_ref[...] += jnp.dot(a_ref[...], b_ref[...],
                            preferred_element_type=jnp.float32)

    @pl.when(k == pl.num_programs(2) - 1)
    def _():
        out = acc_ref[...] * s_ref[...] + t_ref[...] + r_ref[...].astype(jnp.float32)
        if relu:
            out = jnp.maximum(out, 0.0)
        o_ref[...] = out.astype(o_ref.dtype)


def _maxpool_kernel(p_ref, o_ref):
    # p_ref: [9, tm, C] window slabs -> elementwise max over the 9 taps.
    acc = p_ref[0]
    for i in range(1, 9):
        acc = jnp.maximum(acc, p_ref[i])
    o_ref[...] = acc


# ----------------------------------------------------------------------------
# Tile selection (chosen so M/K/N of real resnet50 layers never need padding)
# ----------------------------------------------------------------------------
def _pick_m_tile(M):
    if M <= 512:
        return M, M                       # full-dim block: always legal, no pad
    for c in range(512, 127, -16):        # largest divisor <= 512, multiple of 16
        if M % c == 0:
            return c, M
    for c in range(512, 127, -8):         # fall back to multiple of 8
        if M % c == 0:
            return c, M
    return 256, _round_up(M, 256)         # rare fallback: pad M


def _pick_k_tile(K):
    if K <= 1152:
        return K, K                       # single K block, full-dim (no pad, no k loop)
    for c in (1152, 1024, 896, 768, 640, 512, 384, 256, 128):  # multiples of 128
        if K % c == 0:
            return c, K
    return 512, _round_up(K, 512)         # rare fallback: pad K


def _pick_n_tile(N):
    if N % 256 == 0:
        return 256
    if N % 128 == 0:
        return 128
    return N                              # full-dim block (e.g. N=64, N=126)


# ----------------------------------------------------------------------------
# Cached, shape-specialized wrappers around pallas_call
# ----------------------------------------------------------------------------
@functools.lru_cache(maxsize=None)
def _build_matmul(M, K, N, relu, has_res, out_dtype):
    tm, Mp = _pick_m_tile(M)
    tk, Kp = _pick_k_tile(K)
    tn = _pick_n_tile(N)
    nk = Kp // tk

    if nk == 1:
        grid = (Mp // tm, N // tn)
        a_map = lambda i, j: (i, 0)
        b_map = lambda i, j: (0, j)
        v_map = lambda i, j: (0, j)
        o_map = lambda i, j: (i, j)
        dim_sem = ("parallel", "parallel")
        scratch = []
        kern = _mm_single_res_kernel if has_res else _mm_single_kernel
    else:
        grid = (Mp // tm, N // tn, nk)
        a_map = lambda i, j, k: (i, k)
        b_map = lambda i, j, k: (k, j)
        v_map = lambda i, j, k: (0, j)
        o_map = lambda i, j, k: (i, j)
        dim_sem = ("parallel", "parallel", "arbitrary")
        scratch = [pltpu.VMEM((tm, tn), jnp.float32)]
        kern = _mm_res_kernel if has_res else _mm_kernel

    kernel = functools.partial(kern, relu=relu)
    in_specs = [
        pl.BlockSpec((tm, tk), a_map),
        pl.BlockSpec((tk, tn), b_map),
        pl.BlockSpec((1, tn), v_map),
        pl.BlockSpec((1, tn), v_map),
    ]
    if has_res:
        in_specs.append(pl.BlockSpec((tm, tn), o_map))

    elem = jnp.dtype(out_dtype).itemsize
    bytes_accessed = (M * K + K * N) * 2 + M * N * elem
    if has_res:
        bytes_accessed += M * N * 2

    call = pl.pallas_call(
        kernel,
        out_shape=jax.ShapeDtypeStruct((Mp, N), out_dtype),
        grid_spec=pltpu.PrefetchScalarGridSpec(
            num_scalar_prefetch=0,
            grid=grid,
            in_specs=in_specs,
            out_specs=pl.BlockSpec((tm, tn), o_map),
            scratch_shapes=scratch,
        ),
        compiler_params=pltpu.CompilerParams(
            dimension_semantics=dim_sem,
            vmem_limit_bytes=VMEM_LIMIT_BYTES),
        cost_estimate=pl.CostEstimate(flops=2 * M * N * K, transcendentals=0,
                                      bytes_accessed=bytes_accessed),
    )

    def _prep_ab(a, b):
        a = a.astype(jnp.bfloat16)
        b = b.astype(jnp.bfloat16)
        if Mp != M or Kp != K:
            a = jnp.pad(a, ((0, Mp - M), (0, Kp - K)))
        if Kp != K:
            b = jnp.pad(b, ((0, Kp - K), (0, 0)))
        return a, b

    if has_res:
        def fn(a, b, scale, bias, residual):
            a, b = _prep_ab(a, b)
            s = scale.reshape(1, N).astype(jnp.float32)
            t = bias.reshape(1, N).astype(jnp.float32)
            r = residual
            if Mp != M:
                r = jnp.pad(r, ((0, Mp - M), (0, 0)))
            out = call(a, b, s, t, r)
            return out[:M] if Mp != M else out
    else:
        def fn(a, b, scale, bias):
            a, b = _prep_ab(a, b)
            s = scale.reshape(1, N).astype(jnp.float32)
            t = bias.reshape(1, N).astype(jnp.float32)
            out = call(a, b, s, t)
            return out[:M] if Mp != M else out

    return jax.jit(fn)


def matmul_scale_bias(a, b, scale, bias, *, relu=False, residual=None,
                      out_dtype=jnp.float32):
    M, K = a.shape
    N = b.shape[1]
    fn = _build_matmul(int(M), int(K), int(N), bool(relu),
                       residual is not None, jnp.dtype(out_dtype))
    if residual is not None:
        return fn(a, b, scale, bias, residual)
    return fn(a, b, scale, bias)


@functools.lru_cache(maxsize=None)
def _build_maxpool_reduce(M, C, dtype):
    Mp = _round_up(M, 16)
    tm = min(Mp, 512)
    Mp = _round_up(Mp, tm)

    call = pl.pallas_call(
        _maxpool_kernel,
        out_shape=jax.ShapeDtypeStruct((Mp, C), dtype),
        grid=(Mp // tm,),
        in_specs=[pl.BlockSpec((9, tm, C), lambda i: (0, i, 0))],
        out_specs=pl.BlockSpec((tm, C), lambda i: (i, 0)),
        compiler_params=pltpu.CompilerParams(
            dimension_semantics=("parallel",),
            vmem_limit_bytes=VMEM_LIMIT_BYTES),
    )

    def fn(patches):  # [9, M, C]
        if Mp != M:
            patches = jnp.pad(patches, ((0, 0), (0, Mp - M), (0, 0)),
                              constant_values=NEG_BIG)
        out = call(patches)
        return out[:M] if Mp != M else out

    return jax.jit(fn)


# ----------------------------------------------------------------------------
# Plain-JAX glue: im2col, conv/pool wrappers, fused block/stem/head jits
# ----------------------------------------------------------------------------
def _im2col(x, kh, kw, stride, pad):
    """x: [N, H, W, C] -> bf16 patches [N*oh*ow, kh*kw*C], column order (ki, kj, c).

    1x1 convs skip the whole machinery (pure reshape / strided slice)."""
    N, H, W, C = x.shape
    x = x.astype(jnp.bfloat16)
    oh = (H + 2 * pad - kh) // stride + 1
    ow = (W + 2 * pad - kw) // stride + 1
    if kh == 1 and kw == 1 and pad == 0:
        p = x[:, ::stride, ::stride, :]
        return p.reshape(N * oh * ow, C), oh, ow
    xp = jnp.pad(x, ((0, 0), (pad, pad), (pad, pad), (0, 0)))
    cols = []
    for i in range(kh):
        for j in range(kw):
            cols.append(xp[:, i:i + stride * (oh - 1) + 1:stride,
                           j:j + stride * (ow - 1) + 1:stride, :])
    patches = jnp.stack(cols, axis=3)  # [N, oh, ow, kh*kw, C]
    return patches.reshape(N * oh * ow, kh * kw * C), oh, ow


def _conv_apply(x, wsb, *, kh, kw, stride, pad, relu, residual=None):
    """Conv2d (no bias) + folded BatchNorm2d [+ residual] [+ ReLU] via Pallas matmul.

    Output is bf16 (feeds the next conv / pool)."""
    w, scale, bias = wsb
    patches, oh, ow = _im2col(x, kh, kw, stride, pad)
    cout = w.shape[1]
    res = residual.reshape(-1, cout) if residual is not None else None
    out = matmul_scale_bias(patches, w, scale, bias, relu=relu, residual=res,
                            out_dtype=jnp.bfloat16)
    return out.reshape(x.shape[0], oh, ow, cout)


def _maxpool3x3s2(x):
    """MaxPool2d(kernel=3, stride=2, padding=1), NHWC, any dtype."""
    N, H, W, C = x.shape
    xp = jnp.pad(x, ((0, 0), (1, 1), (1, 1), (0, 0)), constant_values=NEG_BIG)
    oh = (H - 1) // 2 + 1
    ow = (W - 1) // 2 + 1
    cols = []
    for i in range(3):
        for j in range(3):
            cols.append(xp[:, i:i + 2 * (oh - 1) + 1:2,
                           j:j + 2 * (ow - 1) + 1:2, :])
    patches = jnp.stack(cols, axis=0).reshape(9, N * oh * ow, C)
    out = _build_maxpool_reduce(int(N * oh * ow), int(C), patches.dtype)(patches)
    return out.reshape(N, oh, ow, C)


@jax.jit
def _stem_impl(x_nchw, w, scale, bias):
    # NCHW -> NHWC, cast to bf16 once; ImageNormalizer is folded into (w, bias).
    x = jnp.transpose(x_nchw, (0, 2, 3, 1)).astype(jnp.bfloat16)
    x = _conv_apply(x, (w, scale, bias), kh=7, kw=7, stride=2, pad=3, relu=True)
    return _maxpool3x3s2(x)


@functools.partial(jax.jit, static_argnames=('stride', 'has_down'))
def _bottleneck_impl(x, c1, c2, c3, cd, *, stride, has_down):
    """torchvision ResNet Bottleneck (expansion=4, stride on the 3x3 conv).

    Residual add + final ReLU is fused into the conv3 matmul epilogue."""
    out = _conv_apply(x, c1, kh=1, kw=1, stride=1, pad=0, relu=True)
    out = _conv_apply(out, c2, kh=3, kw=3, stride=stride, pad=1, relu=True)
    if has_down:
        identity = _conv_apply(x, cd, kh=1, kw=1, stride=stride, pad=0, relu=False)
    else:
        identity = x
    return _conv_apply(out, c3, kh=1, kw=1, stride=1, pad=0, relu=True,
                       residual=identity)


@jax.jit
def _head_impl(x, fc_w, fc_s, fc_b, cls_w, cls_s, cls_b):
    # global average pooling (tiny reduction, plain-JAX glue), in f32
    feat = jnp.mean(x.astype(jnp.float32), axis=(1, 2))            # [N, 2048]
    # model.fc (2048 -> 256) fused with BatchNorm1d(256) (eval stats pre-folded)
    feat = matmul_scale_bias(feat, fc_w, fc_s, fc_b, relu=False)   # [N, 256] f32
    # weight-normalized classifier: logits = feat @ W^T + b
    logits = matmul_scale_bias(feat, cls_w, cls_s, cls_b, relu=False)
    return feat, logits


def bottleneck(x, blk):
    def _wsb(name):
        c = blk[name]
        return (c['w'], c['scale'], c['bias'])
    has_down = 'convd' in blk
    return _bottleneck_impl(x, _wsb('conv1'), _wsb('conv2'), _wsb('conv3'),
                            _wsb('convd') if has_down else None,
                            stride=blk['stride'], has_down=has_down)


# ----------------------------------------------------------------------------
# Deterministic parameter construction (synthetic weights, resnet50 shapes)
# ----------------------------------------------------------------------------
class _Init:
    def __init__(self, seed):
        self.key = jax.random.PRNGKey(seed)

    def normal(self, shape, scale=0.05):
        self.key, sub = jax.random.split(self.key)
        return scale * jax.random.normal(sub, shape, dtype=jnp.float32)


def _bn_params(c):
    # (gamma, beta, running_mean, running_var)
    return (jnp.ones((c,), jnp.float32), jnp.zeros((c,), jnp.float32),
            jnp.zeros((c,), jnp.float32), jnp.ones((c,), jnp.float32))


def _make_bottleneck(rng, inplanes, planes, stride, downsample):
    p = {
        'conv1': rng.normal((planes, inplanes, 1, 1)),
        'bn1': _bn_params(planes),
        'conv2': rng.normal((planes, planes, 3, 3)),
        'bn2': _bn_params(planes),
        'conv3': rng.normal((planes * 4, planes, 1, 1)),
        'bn3': _bn_params(planes * 4),
        'stride': stride,
    }
    if downsample:
        p['convd'] = rng.normal((planes * 4, inplanes, 1, 1))
        p['bnd'] = _bn_params(planes * 4)
    return p


def _make_layer(rng, inplanes, planes, blocks, stride):
    layer = [_make_bottleneck(rng, inplanes, planes, stride, True)]
    for _ in range(blocks - 1):
        layer.append(_make_bottleneck(rng, planes * 4, planes, 1, False))
    return layer


def make_params(seed=0, num_classes=126, bottleneck_dim=256):
    rng = _Init(seed)
    p = {
        'conv1': rng.normal((64, 3, 7, 7)),
        'bn1': _bn_params(64),
        'layer1': _make_layer(rng, 64, 64, 3, 1),
        'layer2': _make_layer(rng, 256, 128, 4, 2),
        'layer3': _make_layer(rng, 512, 256, 6, 2),
        'layer4': _make_layer(rng, 1024, 512, 3, 2),
        # model.fc replaced by Linear(2048, bottleneck_dim)
        'fc_w': rng.normal((bottleneck_dim, 2048)),
        'fc_b': jnp.zeros((bottleneck_dim,), jnp.float32),
        'bn1d': _bn_params(bottleneck_dim),
        # weight-normalized classifier (dim=0): W = g * v / ||v||_row
        'cls_v': rng.normal((num_classes, bottleneck_dim)),
        'cls_b': jnp.zeros((num_classes,), jnp.float32),
    }
    p['cls_g'] = jnp.sqrt(jnp.sum(p['cls_v'] ** 2, axis=1))  # torch weight_norm init
    return p


def fold_params(p):
    """Fold BN stats (and the input ImageNormalizer for the stem) into per-channel
    scale/bias, pre-reshape/cast weights once."""
    def fold_conv(w, bn, input_norm=None):
        cout, cin, kh, kw = w.shape
        gamma, beta, mean, var = bn
        scale = gamma / jnp.sqrt(var + BN_EPS)
        bias = beta - mean * scale
        if input_norm is not None:
            # conv((x - m)/s) == conv_{w/s}(x) - sum(w/s * m); fold into weight + bias.
            im, istd = input_norm
            w = w / istd[None, :, None, None]
            extra = -jnp.sum(w * im[None, :, None, None], axis=(1, 2, 3))
            bias = bias + scale * extra
        w2 = jnp.transpose(w, (2, 3, 1, 0)).reshape(kh * kw * cin, cout)
        return {'w': w2.astype(jnp.bfloat16), 'scale': scale, 'bias': bias,
                'kh': kh, 'kw': kw}

    def fold_block(blk):
        out = {'stride': blk['stride'],
               'conv1': fold_conv(blk['conv1'], blk['bn1']),
               'conv2': fold_conv(blk['conv2'], blk['bn2']),
               'conv3': fold_conv(blk['conv3'], blk['bn3'])}
        if 'convd' in blk:
            out['convd'] = fold_conv(blk['convd'], blk['bnd'])
        return out

    folded = {'stem': fold_conv(p['conv1'], p['bn1'],
                                input_norm=(_IMG_MEAN, _IMG_STD))}
    for name in ('layer1', 'layer2', 'layer3', 'layer4'):
        folded[name] = [fold_block(b) for b in p[name]]

    # model.fc (2048 -> 256) fused with BatchNorm1d(256) (eval mode)
    gamma, beta, mean, var = p['bn1d']
    s = gamma / jnp.sqrt(var + BN_EPS)
    t = beta + (p['fc_b'] - mean) * s
    folded['fc'] = {'w': p['fc_w'].T.astype(jnp.bfloat16), 'scale': s, 'bias': t}

    # weight-normalized classifier: W = g * v / ||v||_row
    v = p['cls_v']
    w = v * (p['cls_g'] / jnp.sqrt(jnp.sum(v * v, axis=1)))[:, None]
    folded['cls'] = {'w': w.T.astype(jnp.bfloat16),
                     'scale': jnp.ones((w.shape[0],), jnp.float32),
                     'bias': p['cls_b']}
    return folded


# ----------------------------------------------------------------------------
# Forward pass (ResNetDomainNet126.forward) — takes folded params
# ----------------------------------------------------------------------------
def forward(params, x_nchw, return_feats=False):
    stem = params['stem']
    x = _stem_impl(x_nchw.astype(jnp.float32), stem['w'], stem['scale'], stem['bias'])

    for name in ('layer1', 'layer2', 'layer3', 'layer4'):
        for blk in params[name]:
            x = bottleneck(x, blk)

    feat, logits = _head_impl(
        x, params['fc']['w'], params['fc']['scale'], params['fc']['bias'],
        params['cls']['w'], params['cls']['scale'], params['cls']['bias'])

    # torch.flatten(feat, 1) is a no-op here (feat already 2-D)
    if return_feats:
        return feat, logits
    return logits


if __name__ == "__main__":
    key = jax.random.PRNGKey(0)
    x = jax.random.normal(key, (2, 3, 32, 32), dtype=jnp.float32)  # NCHW, like PyTorch
    raw_params = make_params(seed=0, num_classes=126, bottleneck_dim=256)
    params = fold_params(raw_params)

    logits = forward(params, x)
    logits = jax.block_until_ready(logits)

    assert logits.shape == (2, 126), logits.shape
    assert logits.dtype == jnp.float32
    assert bool(jnp.all(jnp.isfinite(logits)))
    print("KERNEL_OK")
</pallas_src>

<mosaic_0001>
module attributes {stable_mosaic.version = 11 : i64} {
  func.func @_mm_single_kernel(%arg0: i32, %arg1: i32, %arg2: memref<512x147xbf16, #tpu.memory_space<vmem>>, %arg3: memref<147x64xbf16, #tpu.memory_space<vmem>>, %arg4: memref<1x64xf32, #tpu.memory_space<vmem>>, %arg5: memref<1x64xf32, #tpu.memory_space<vmem>>, %arg6: memref<512x64xbf16, #tpu.memory_space<vmem>>) attributes {dimension_semantics = [#tpu.dimension_semantics<parallel>, #tpu.dimension_semantics<parallel>], iteration_bounds = array<i64: 1, 1>, scalar_prefetch = 0 : i64, scratch_operands = 0 : i64, tpu.core_type = #tpu.core_type<tc>, window_params = [{transform_indices = @transform_0, window_bounds = array<i64: 512, 147>}, {transform_indices = @transform_1, window_bounds = array<i64: 147, 64>}, {transform_indices = @transform_2, window_bounds = array<i64: 1, 64>}, {transform_indices = @transform_3, window_bounds = array<i64: 1, 64>}, {transform_indices = @transform_4, window_bounds = array<i64: 512, 64>}]} {
    %c0 = arith.constant 0 : index
    %c0_0 = arith.constant 0 : index
    %0 = vector.load %arg2[%c0, %c0_0] : memref<512x147xbf16, #tpu.memory_space<vmem>>, vector<512x147xbf16>
    %c0_1 = arith.constant 0 : index
    %c0_2 = arith.constant 0 : index
    %1 = vector.load %arg3[%c0_1, %c0_2] : memref<147x64xbf16, #tpu.memory_space<vmem>>, vector<147x64xbf16>
    %cst = arith.constant dense<0.000000e+00> : vector<512x64xf32>
    %2 = tpu.matmul %0, %1, %cst {dimension_numbers = #tpu.dot_dimension_numbers<[1], [0], [0], [1], [0, 0, 1, 1], [], []>} : vector<512x147xbf16>, vector<147x64xbf16>, vector<512x64xf32> -> vector<512x64xf32>
    %c0_3 = arith.constant 0 : index
    %c0_4 = arith.constant 0 : index
    %3 = vector.load %arg4[%c0_3, %c0_4] : memref<1x64xf32, #tpu.memory_space<vmem>>, vector<1x64xf32>
    %4 = vector.broadcast %3 : vector<1x64xf32> to vector<512x64xf32>
    %5 = arith.mulf %2, %4 : vector<512x64xf32>
    %c0_5 = arith.constant 0 : index
    %c0_6 = arith.constant 0 : index
    %6 = vector.load %arg5[%c0_5, %c0_6] : memref<1x64xf32, #tpu.memory_space<vmem>>, vector<1x64xf32>
    %7 = vector.broadcast %6 : vector<1x64xf32> to vector<512x64xf32>
    %8 = arith.addf %5, %7 : vector<512x64xf32>
    %cst_7 = arith.constant 0.000000e+00 : f32
    %9 = vector.broadcast %cst_7 : f32 to vector<512x64xf32>
    %10 = arith.maximumf %8, %9 : vector<512x64xf32>
    %11 = arith.truncf %10 : vector<512x64xf32> to vector<512x64xbf16>
    %c0_8 = arith.constant 0 : index
    %c0_9 = arith.constant 0 : index
    %12 = vector.load %arg6[%c0_8, %c0_9] : memref<512x64xbf16, #tpu.memory_space<vmem>>, vector<512x64xbf16>
    tpu.vector_store %arg6[%c0_8, %c0_9], %11 {strides = array<i32>} : memref<512x64xbf16, #tpu.memory_space<vmem>>, vector<512x64xbf16>,
    return
  }
  func.func @transform_0(%arg0: i32, %arg1: i32) -> (i32, i32) {
    %c0_i32 = arith.constant 0 : i32
    %c0_i32_0 = arith.constant 0 : i32
    return %arg0, %c0_i32 : i32, i32
  }
  func.func @transform_1(%arg0: i32, %arg1: i32) -> (i32, i32) {
    %c0_i32 = arith.constant 0 : i32
    %c0_i32_0 = arith.constant 0 : i32
    return %c0_i32, %arg1 : i32, i32
  }
  func.func @transform_2(%arg0: i32, %arg1: i32) -> (i32, i32) {
    %c0_i32 = arith.constant 0 : i32
    %c0_i32_0 = arith.constant 0 : i32
    return %c0_i32, %arg1 : i32, i32
  }
  func.func @transform_3(%arg0: i32, %arg1: i32) -> (i32, i32) {
    %c0_i32 = arith.constant 0 : i32
    %c0_i32_0 = arith.constant 0 : i32
    return %c0_i32, %arg1 : i32, i32
  }
  func.func @transform_4(%arg0: i32, %arg1: i32) -> (i32, i32) {
    %c0_i32 = arith.constant 0 : i32
    return %arg0, %arg1 : i32, i32
  }
}

</mosaic_0001>

<llo_original>
// kernel: fn.1
$region0: #{fn.1}
  #allocation0 [shape = 'u32[]', space=smem, size = 0x4, offset = 0x4, fixed_abs, tag = 'smem constant byte address 0x4 - core index']
  #allocation1 [shape = 'u32[144,128]{1,0:T(1,128)}', space=vmem, size = 0x12000, scoped, tag = 'internal scratch']
  %s0 = inlined_call_operand.vmem [shape: bf16[512,147], index: 0, kind: input, shape index: {}]
  %s1 = inlined_call_operand.vmem [shape: bf16[147,64], index: 1, kind: input, shape index: {}]
  %s2 = inlined_call_operand.vmem [shape: f32[1,64], index: 2, kind: input, shape index: {}]
  %s3 = inlined_call_operand.vmem [shape: f32[1,64], index: 3, kind: input, shape index: {}]
  %s4 = inlined_call_operand.vmem [shape: bf16[512,64], index: 4, kind: output, shape index: {}]
  %s5 = sld [smem:[#allocation0]]
  $region26: #{fn.1} parent=0
    _
  %s7 = ssub.s32 1, %s5
  %s8 = scalar_select 0, %s7, %s5
  // Predicated region
  $region2: #{fn.1} parent=0 // pred_check
    _
  $region3: #{fn.1} parent=0 // pred_check_branch
    %10 = sbr.rel (0) target = $region5
  $region4: #{fn.1} parent=0 // pred_region
    _
  $region5: #{fn.1} parent=0 // pred_fallthru
    _
  // Predicated region
  $region6: #{fn.1} parent=0 // pred_check
    _
  $region7: #{fn.1} parent=0 // pred_check_branch
    %12 = sbr.rel (0) target = $region9
  $region8: #{fn.1} parent=0 // pred_region
    _
  $region9: #{fn.1} parent=0 // pred_fallthru
    _
  // Predicated region
  $region10: #{fn.1} parent=0 // pred_check
    _
  $region11: #{fn.1} parent=0 // pred_check_branch
    %14 = sbr.rel (0) target = $region13
  $region12: #{fn.1} parent=0 // pred_region
    _
  $region13: #{fn.1} parent=0 // pred_fallthru
    _
  // Predicated region
  $region14: #{fn.1} parent=0 // pred_check
    _
  $region15: #{fn.1} parent=0 // pred_check_branch
    %16 = sbr.rel (0) target = $region17
  $region16: #{fn.1} parent=0 // pred_region
    _
  $region17: #{fn.1} parent=0 // pred_fallthru
    _
  %v18 = vld [vmem:[%s0] sm:$0xff]
  %v19 = vld [vmem:[%s0 + $0x8] sm:$0xff]
  %v20 = vld [vmem:[%s0 + $0x10] sm:$0xff]
  %v21 = vld [vmem:[%s0 + $0x18] sm:$0xff]
  %v22 = vld [vmem:[%s0 + $0x20] sm:$0xff]
  %v23 = vld [vmem:[%s0 + $0x28] sm:$0xff]
  %v24 = vld [vmem:[%s0 + $0x30] sm:$0xff]
  %v25 = vld [vmem:[%s0 + $0x38] sm:$0xff]
  %v26 = vld [vmem:[%s0 + $0x40] sm:$0xff]
  %v27 = vld [vmem:[%s0 + $0x48] sm:$0xff]
  %v28 = vld [vmem:[%s0 + $0x50] sm:$0xff]
  %v29 = vld [vmem:[%s0 + $0x58] sm:$0xff]
  %v30 = vld [vmem:[%s0 + $0x60] sm:$0xff]
  %v31 = vld [vmem:[%s0 + $0x68] sm:$0xff]
  %v32 = vld [vmem:[%s0 + $0x70] sm:$0xff]
  %v33 = vld [vmem:[%s0 + $0x78] sm:$0xff]
  %v34 = vld [vmem:[%s0 + $0x80] sm:$0xff]
  %v35 = vld [vmem:[%s0 + $0x88] sm:$0xff]
  %v36 = vld [vmem:[%s0 + $0x90] sm:$0xff]
  %v37 = vld [vmem:[%s0 + $0x98] sm:$0xff]
  %v38 = vld [vmem:[%s0 + $0xa0] sm:$0xff]
  %v39 = vld [vmem:[%s0 + $0xa8] sm:$0xff]
  %v40 = vld [vmem:[%s0 + $0xb0] sm:$0xff]
  %v41 = vld [vmem:[%s0 + $0xb8] sm:$0xff]
  %v42 = vld [vmem:[%s0 + $0xc0] sm:$0xff]
  %v43 = vld [vmem:[%s0 + $0xc8] sm:$0xff]
  %v44 = vld [vmem:[%s0 + $0xd0] sm:$0xff]
  %v45 = vld [vmem:[%s0 + $0xd8] sm:$0xff]
  %v46 = vld [vmem:[%s0 + $0xe0] sm:$0xff]
  %v47 = vld [vmem:[%s0 + $0xe8] sm:$0xff]
  %v48 = vld [vmem:[%s0 + $0xf0] sm:$0xff]
  %v49 = vld [vmem:[%s0 + $0xf8] sm:$0xff]
  %v50 = vld [vmem:[%s0 + $0x100] sm:$0xff]
  %v51 = vld [vmem:[%s0 + $0x108] sm:$0xff]
  %v52 = vld [vmem:[%s0 + $0x110] sm:$0xff]
  %v53 = vld [vmem:[%s0 + $0x118] sm:$0xff]
  %v54 = vld [vmem:[%s0 + $0x120] sm:$0xff]
  %v55 = vld [vmem:[%s0 + $0x128] sm:$0xff]
  %v56 = vld [vmem:[%s0 + $0x130] sm:$0xff]
  %v57 = vld [vmem:[%s0 + $0x138] sm:$0xff]
  %v58 = vld [vmem:[%s0 + $0x140] sm:$0xff]
  %v59 = vld [vmem:[%s0 + $0x148] sm:$0xff]
  %v60 = vld [vmem:[%s0 + $0x150] sm:$0xff]
  %v61 = vld [vmem:[%s0 + $0x158] sm:$0xff]
  %v62 = vld [vmem:[%s0 + $0x160] sm:$0xff]
  %v63 = vld [vmem:[%s0 + $0x168] sm:$0xff]
  %v64 = vld [vmem:[%s0 + $0x170] sm:$0xff]
  %v65 = vld [vmem:[%s0 + $0x178] sm:$0xff]
  %v66 = vld [vmem:[%s0 + $0x180] sm:$0xff]
  %v67 = vld [vmem:[%s0 + $0x188] sm:$0xff]
  %v68 = vld [vmem:[%s0 + $0x190] sm:$0xff]
  %v69 = vld [vmem:[%s0 + $0x198] sm:$0xff]
  %v70 = vld [vmem:[%s0 + $0x1a0] sm:$0xff]
  %v71 = vld [vmem:[%s0 + $0x1a8] sm:$0xff]
  %v72 = vld [vmem:[%s0 + $0x1b0] sm:$0xff]
  %v73 = vld [vmem:[%s0 + $0x1b8] sm:$0xff]
  %v74 = vld [vmem:[%s0 + $0x1c0] sm:$0xff]
  %v75 = vld [vmem:[%s0 + $0x1c8] sm:$0xff]
  %v76 = vld [vmem:[%s0 + $0x1d0] sm:$0xff]
  %v77 = vld [vmem:[%s0 + $0x1d8] sm:$0xff]
  %v78 = vld [vmem:[%s0 + $0x1e0] sm:$0xff]
  %v79 = vld [vmem:[%s0 + $0x1e8] sm:$0xff]
  %v80 = vld [vmem:[%s0 + $0x1f0] sm:$0xff]
  %v81 = vld [vmem:[%s0 + $0x1f8] sm:$0xff]
  %v82 = vld [vmem:[%s1] sm:$0xf]
  %v83 = vld [vmem:[%s1 + $0x4] sm:$0xf]
  %v84 = vld [vmem:[%s1 + $0x8] sm:$0xf]
  %v85 = vld [vmem:[%s1 + $0xc] sm:$0xf]
  %v86 = vld [vmem:[%s1 + $0x10] sm:$0xf]
  %v87 = vld [vmem:[%s1 + $0x14] sm:$0xf]
  %v88 = vld [vmem:[%s1 + $0x18] sm:$0xf]
  %v89 = vld [vmem:[%s1 + $0x1c] sm:$0xf]
  %v90 = vld [vmem:[%s1 + $0x20] sm:$0xf]
  %v91 = vld [vmem:[%s1 + $0x24] sm:$0xf]
  %v92 = vld [vmem:[%s1 + $0x28] sm:$0xf]
  %v93 = vld [vmem:[%s1 + $0x2c] sm:$0xf]
  %v94 = vld [vmem:[%s1 + $0x30] sm:$0xf]
  %v95 = vld [vmem:[%s1 + $0x34] sm:$0xf]
  %v96 = vld [vmem:[%s1 + $0x38] sm:$0xf]
  %v97 = vld [vmem:[%s1 + $0x3c] sm:$0xf]
  %v98 = vld [vmem:[%s1 + $0x40] sm:$0xf]
  %v99 = vld [vmem:[%s1 + $0x44] sm:$0xf]
  %v100 = vld [vmem:[%s1 + $0x48] sm:$0x3]
  %v165 = vunpack.c.l.b16 %v18
  %v166 = vunpack.c.h.b16 %v18
  %v167 = vunpack.c.l.b16 %v19
  %v168 = vunpack.c.h.b16 %v19
  %v169 = vunpack.c.l.b16 %v20
  %v170 = vunpack.c.h.b16 %v20
  %v171 = vunpack.c.l.b16 %v21
  %v172 = vunpack.c.h.b16 %v21
  %v173 = vunpack.c.l.b16 %v22
  %v174 = vunpack.c.h.b16 %v22
  %v175 = vunpack.c.l.b16 %v23
  %v176 = vunpack.c.h.b16 %v23
  %v177 = vunpack.c.l.b16 %v24
  %v178 = vunpack.c.h.b16 %v24
  %v179 = vunpack.c.l.b16 %v25
  %v180 = vunpack.c.h.b16 %v25
  %v181 = vunpack.c.l.b16 %v26
  %v182 = vunpack.c.h.b16 %v26
  %v183 = vunpack.c.l.b16 %v27
  %v184 = vunpack.c.h.b16 %v27
  %v185 = vunpack.c.l.b16 %v28
  %v186 = vunpack.c.h.b16 %v28
  %v187 = vunpack.c.l.b16 %v29
  %v188 = vunpack.c.h.b16 %v29
  %v189 = vunpack.c.l.b16 %v30
  %v190 = vunpack.c.h.b16 %v30
  %v191 = vunpack.c.l.b16 %v31
  %v192 = vunpack.c.h.b16 %v31
  %v193 = vunpack.c.l.b16 %v32
  %v194 = vunpack.c.h.b16 %v32
  %v195 = vunpack.c.l.b16 %v33
  %v196 = vunpack.c.h.b16 %v33
  %v197 = vunpack.c.l.b16 %v34
  %v198 = vunpack.c.h.b16 %v34
  %v199 = vunpack.c.l.b16 %v35
  %v200 = vunpack.c.h.b16 %v35
  %v201 = vunpack.c.l.b16 %v36
  %v202 = vunpack.c.h.b16 %v36
  %v203 = vunpack.c.l.b16 %v37
  %v204 = vunpack.c.h.b16 %v37
  %v205 = vunpack.c.l.b16 %v38
  %v206 = vunpack.c.h.b16 %v38
  %v207 = vunpack.c.l.b16 %v39
  %v208 = vunpack.c.h.b16 %v39
  %v209 = vunpack.c.l.b16 %v40
  %v210 = vunpack.c.h.b16 %v40
  %v211 = vunpack.c.l.b16 %v41
  %v212 = vunpack.c.h.b16 %v41
  %v213 = vunpack.c.l.b16 %v42
  %v214 = vunpack.c.h.b16 %v42
  %v215 = vunpack.c.l.b16 %v43
  %v216 = vunpack.c.h.b16 %v43
  %v217 = vunpack.c.l.b16 %v44
  %v218 = vunpack.c.h.b16 %v44
  %v219 = vunpack.c.l.b16 %v45
  %v220 = vunpack.c.h.b16 %v45
  %v221 = vunpack.c.l.b16 %v46
  %v222 = vunpack.c.h.b16 %v46
  %v223 = vunpack.c.l.b16 %v47
  %v224 = vunpack.c.h.b16 %v47
  %v225 = vunpack.c.l.b16 %v48
  %v226 = vunpack.c.h.b16 %v48
  %v227 = vunpack.c.l.b16 %v49
  %v228 = vunpack.c.h.b16 %v49
  %v229 = vunpack.c.l.b16 %v50
  %v230 = vunpack.c.h.b16 %v50
  %v231 = vunpack.c.l.b16 %v51
  %v232 = vunpack.c.h.b16 %v51
  %v233 = vunpack.c.l.b16 %v52
  %v234 = vunpack.c.h.b16 %v52
  %v235 = vunpack.c.l.b16 %v53
  %v236 = vunpack.c.h.b16 %v53
  %v237 = vunpack.c.l.b16 %v54
  %v238 = vunpack.c.h.b16 %v54
  %v239 = vunpack.c.l.b16 %v55
  %v240 = vunpack.c.h.b16 %v55
  %v241 = vunpack.c.l.b16 %v56
  %v242 = vunpack.c.h.b16 %v56
  %v243 = vunpack.c.l.b16 %v57
  %v244 = vunpack.c.h.b16 %v57
  %v245 = vunpack.c.l.b16 %v58
  %v246 = vunpack.c.h.b16 %v58
  %v247 = vunpack.c.l.b16 %v59
  %v248 = vunpack.c.h.b16 %v59
  %v249 = vunpack.c.l.b16 %v60
  %v250 = vunpack.c.h.b16 %v60
  %v251 = vunpack.c.l.b16 %v61
  %v252 = vunpack.c.h.b16 %v61
  %v253 = vunpack.c.l.b16 %v62
  %v254 = vunpack.c.h.b16 %v62
  %v255 = vunpack.c.l.b16 %v63
  %v256 = vunpack.c.h.b16 %v63
  %v257 = vunpack.c.l.b16 %v64
  %v258 = vunpack.c.h.b16 %v64
  %v259 = vunpack.c.l.b16 %v65
  %v260 = vunpack.c.h.b16 %v65
  %v261 = vunpack.c.l.b16 %v66
  %v262 = vunpack.c.h.b16 %v66
  %v263 = vunpack.c.l.b16 %v67
  %v264 = vunpack.c.h.b16 %v67
  %v265 = vunpack.c.l.b16 %v68
  %v266 = vunpack.c.h.b16 %v68
  %v267 = vunpack.c.l.b16 %v69
  %v268 = vunpack.c.h.b16 %v69
  %v269 = vunpack.c.l.b16 %v70
  %v270 = vunpack.c.h.b16 %v70
  %v271 = vunpack.c.l.b16 %v71
  %v272 = vunpack.c.h.b16 %v71
  %v273 = vunpack.c.l.b16 %v72
  %v274 = vunpack.c.h.b16 %v72
  %v275 = vunpack.c.l.b16 %v73
  %v276 = vunpack.c.h.b16 %v73
  %v277 = vunpack.c.l.b16 %v74
  %v278 = vunpack.c.h.b16 %v74
  %v279 = vunpack.c.l.b16 %v75
  %v280 = vunpack.c.h.b16 %v75
  %v281 = vunpack.c.l.b16 %v76
  %v282 = vunpack.c.h.b16 %v76
  %v283 = vunpack.c.l.b16 %v77
  %v284 = vunpack.c.h.b16 %v77
  %v285 = vunpack.c.l.b16 %v78
  %v286 = vunpack.c.h.b16 %v78
  %v287 = vunpack.c.l.b16 %v79
  %v288 = vunpack.c.h.b16 %v79
  %v289 = vunpack.c.l.b16 %v80
  %v290 = vunpack.c.h.b16 %v80
  %v291 = vunpack.c.l.b16 %v81
  %v292 = vunpack.c.h.b16 %v81
  %v293 = vpack.c.b16 %v167, %v165
  %v294 = vpack.c.b16 %v168, %v166
  %v295 = vpack.c.b16 %v171, %v169
  %v296 = vpack.c.b16 %v172, %v170
  %v297 = vpack.c.b16 %v175, %v173
  %v298 = vpack.c.b16 %v176, %v174
  %v299 = vpack.c.b16 %v179, %v177
  %v300 = vpack.c.b16 %v180, %v178
  %v301 = vpack.c.b16 %v183, %v181
  %v302 = vpack.c.b16 %v184, %v182
  %v303 = vpack.c.b16 %v187, %v185
  %v304 = vpack.c.b16 %v188, %v186
  %v305 = vpack.c.b16 %v191, %v189
  %v306 = vpack.c.b16 %v192, %v190
  %v307 = vpack.c.b16 %v195, %v193
  %v308 = vpack.c.b16 %v196, %v194
  %v309 = vpack.c.b16 %v199, %v197
  %v310 = vpack.c.b16 %v200, %v198
  %v311 = vpack.c.b16 %v203, %v201
  %v312 = vpack.c.b16 %v204, %v202
  %v313 = vpack.c.b16 %v207, %v205
  %v314 = vpack.c.b16 %v208, %v206
  %v315 = vpack.c.b16 %v211, %v209
  %v316 = vpack.c.b16 %v212, %v210
  %v317 = vpack.c.b16 %v215, %v213
  %v318 = vpack.c.b16 %v216, %v214
  %v319 = vpack.c.b16 %v219, %v217
  %v320 = vpack.c.b16 %v220, %v218
  %v321 = vpack.c.b16 %v223, %v221
  %v322 = vpack.c.b16 %v224, %v222
  %v323 = vpack.c.b16 %v227, %v225
  %v324 = vpack.c.b16 %v228, %v226
  %v325 = vpack.c.b16 %v231, %v229
  %v326 = vpack.c.b16 %v232, %v230
  %v327 = vpack.c.b16 %v235, %v233
  %v328 = vpack.c.b16 %v236, %v234
  %v329 = vpack.c.b16 %v239, %v237
  %v330 = vpack.c.b16 %v240, %v238
  %v331 = vpack.c.b16 %v243, %v241
  %v332 = vpack.c.b16 %v244, %v242
  %v333 = vpack.c.b16 %v247, %v245
  %v334 = vpack.c.b16 %v248, %v246
  %v335 = vpack.c.b16 %v251, %v249
  %v336 = vpack.c.b16 %v252, %v250
  %v337 = vpack.c.b16 %v255, %v253
  %v338 = vpack.c.b16 %v256, %v254
  %v339 = vpack.c.b16 %v259, %v257
  %v340 = vpack.c.b16 %v260, %v258
  %v341 = vpack.c.b16 %v263, %v261
  %v342 = vpack.c.b16 %v264, %v262
  %v343 = vpack.c.b16 %v267, %v265
  %v344 = vpack.c.b16 %v268, %v266
  %v345 = vpack.c.b16 %v271, %v269
  %v346 = vpack.c.b16 %v272, %v270
  %v347 = vpack.c.b16 %v275, %v273
  %v348 = vpack.c.b16 %v276, %v274
  %v349 = vpack.c.b16 %v279, %v277
  %v350 = vpack.c.b16 %v280, %v278
  %v351 = vpack.c.b16 %v283, %v281
  %v352 = vpack.c.b16 %v284, %v282
  %v353 = vpack.c.b16 %v287, %v285
  %v354 = vpack.c.b16 %v288, %v286
  %v355 = vpack.c.b16 %v291, %v289
  %v356 = vpack.c.b16 %v292, %v290
  %v408 = vunpack.c.l.b16 %v82
  %v409 = vunpack.c.l.b16 %v83
  %v410 = vunpack.c.l.b16 %v84
  %v411 = vunpack.c.l.b16 %v85
  %v412 = vunpack.c.l.b16 %v86
  %v413 = vunpack.c.l.b16 %v87
  %v414 = vunpack.c.l.b16 %v88
  %v415 = vunpack.c.l.b16 %v89
  %v416 = vunpack.c.l.b16 %v90
  %v417 = vunpack.c.l.b16 %v91
  %v418 = vunpack.c.l.b16 %v92
  %v419 = vunpack.c.l.b16 %v93
  %v420 = vunpack.c.l.b16 %v94
  %v421 = vunpack.c.l.b16 %v95
  %v422 = vunpack.c.l.b16 %v96
  %v423 = vunpack.c.l.b16 %v97
  %v424 = vunpack.c.l.b16 %v98
  %v425 = vunpack.c.l.b16 %v99
  %v426 = vunpack.c.l.b16 %v100
  %v427 = vpack.c.b16 %v409, %v408
  %v428 = vpack.c.b16 %v411, %v410
  %v429 = vpack.c.b16 %v413, %v412
  %v430 = vpack.c.b16 %v415, %v414
  %v431 = vpack.c.b16 %v417, %v416
  %v432 = vpack.c.b16 %v419, %v418
  %v433 = vpack.c.b16 %v421, %v420
  %v434 = vpack.c.b16 %v423, %v422
  %v435 = vpack.c.b16 %v425, %v424
  %v436 = vpack.c.b16 %v426, %v426
  %vm446 = vcmask 154624
  %v448 = vsel %vm446, %v294, 0
  %v451 = vsel %vm446, %v296, 0
  %v454 = vsel %vm446, %v298, 0
  %v457 = vsel %vm446, %v300, 0
  %v460 = vsel %vm446, %v302, 0
  %v463 = vsel %vm446, %v304, 0
  %v466 = vsel %vm446, %v306, 0
  %v469 = vsel %vm446, %v308, 0
  %v472 = vsel %vm446, %v310, 0
  %v475 = vsel %vm446, %v312, 0
  %v478 = vsel %vm446, %v314, 0
  %v481 = vsel %vm446, %v316, 0
  %v484 = vsel %vm446, %v318, 0
  %v487 = vsel %vm446, %v320, 0
  %v490 = vsel %vm446, %v322, 0
  %v493 = vsel %vm446, %v324, 0
  %v496 = vsel %vm446, %v326, 0
  %v499 = vsel %vm446, %v328, 0
  %v502 = vsel %vm446, %v330, 0
  %v505 = vsel %vm446, %v332, 0
  %v508 = vsel %vm446, %v334, 0
  %v511 = vsel %vm446, %v336, 0
  %v514 = vsel %vm446, %v338, 0
  %v517 = vsel %vm446, %v340, 0
  %v520 = vsel %vm446, %v342, 0
  %v523 = vsel %vm446, %v344, 0
  %v526 = vsel %vm446, %v346, 0
  %v529 = vsel %vm446, %v348, 0
  %v532 = vsel %vm446, %v350, 0
  %v535 = vsel %vm446, %v352, 0
  %v538 = vsel %vm446, %v354, 0
  %v541 = vsel %vm446, %v356, 0
  %vm543 = vcmask 1040384
  %vm544 = vcmask 1041408
  %v545 = vsel %vm543, 4294967295, 65535
  %v546 = vsel %vm544, %v545, 0
  %v548 = vand.u32 %v436, %v546
  %550 = vmatprep.subr.bf16.mxu0 0
  %551 = vmatpush1.bf16.msra.mxu0 %v427
  %552 = vmatprep.subr.bf16.mxu0 0
  %553 = vmatpush1.bf16.msra.mxu0 %v428
  %554 = vmatprep.subr.bf16.mxu0 0
  %555 = vmatpush1.bf16.msra.mxu0 %v429
  %556 = vmatprep.subr.bf16.mxu0 0
  %557 = vmatpush1.bf16.msra.mxu0 %v430
  %558 = vmatprep.subr.bf16.mxu0 0
  %559 = vmatpush1.bf16.msra.mxu0 %v431
  %560 = vmatprep.subr.bf16.mxu0 0
  %561 = vmatpush1.bf16.msra.mxu0 %v432
  %562 = vmatprep.subr.bf16.mxu0 0
  %563 = vmatpush1.bf16.msra.mxu0 %v433
  %564 = vmatprep.subr.bf16.mxu0 0
  %565 = vmatpush1.bf16.msra.mxu0 %v434
  %566 = vmatprep.subr.bf16.mxu0 0
  %567 = vmatpush1.bf16.msra.mxu0 %v435
  %568 = vmatprep.subr.bf16.mxu0 0
  %569 = vmatpush1.bf16.msra.mxu0 %v548
  %570 = vmatprep.subr.bf16.mxu0 0
  %571 = vmatpush1.bf16.msra.mxu0 0
  %572 = vmatprep.subr.bf16.mxu0 0
  %573 = vmatpush1.bf16.msra.mxu0 0
  %574 = vmatprep.subr.bf16.mxu0 0
  %575 = vmatpush1.bf16.msra.mxu0 0
  %576 = vmatprep.subr.bf16.mxu0 0
  %577 = vmatpush1.bf16.msra.mxu0 0
  %578 = vmatprep.subr.bf16.mxu0 0
  %579 = vmatpush1.bf16.msra.mxu0 0
  %580 = vmatprep.subr.bf16.mxu0 0
  %581 = vmatpush1.bf16.msra.mxu0 0
  %582 = vmatprep.mubr.bf16.mxu0 %v448
  %583 = vmatmul.mubr.bf16.gmra.mrb[0].mxu0 %v293
  %v584 = vpop.f32.mrb[0].mxu0
  %v585 = vadd.f32 0.0, %v584
  %v586 = vpop.f32.mrb[0].mxu0
  %v587 = vpop.f32.mrb[0].mxu0
  %v588 = vadd.f32 0.0, %v587
  %v589 = vpop.f32.mrb[0].mxu0
  %590 = vmatprep.mubr.bf16.mxu0 %v451
  %591 = vmatmul.mubr.bf16.gmra.mrb[0].mxu0 %v295
  %v592 = vpop.f32.mrb[0].mxu0
  %v593 = vadd.f32 0.0, %v592
  %v594 = vpop.f32.mrb[0].mxu0
  %v595 = vpop.f32.mrb[0].mxu0
  %v596 = vadd.f32 0.0, %v595
  %v597 = vpop.f32.mrb[0].mxu0
  %598 = vmatprep.mubr.bf16.mxu0 %v454
  %599 = vmatmul.mubr.bf16.gmra.mrb[0].mxu0 %v297
  %v600 = vpop.f32.mrb[0].mxu0
  %v601 = vadd.f32 0.0, %v600
  %v602 = vpop.f32.mrb[0].mxu0
  %v603 = vpop.f32.mrb[0].mxu0
  %v604 = vadd.f32 0.0, %v603
  %v605 = vpop.f32.mrb[0].mxu0
  %606 = vmatprep.mubr.bf16.mxu0 %v457
  %607 = vmatmul.mubr.bf16.gmra.mrb[0].mxu0 %v299
  %v608 = vpop.f32.mrb[0].mxu0
  %v609 = vadd.f32 0.0, %v608
  %v610 = vpop.f32.mrb[0].mxu0
  %v611 = vpop.f32.mrb[0].mxu0
  %v612 = vadd.f32 0.0, %v611
  %v613 = vpop.f32.mrb[0].mxu0
  %614 = vmatprep.mubr.bf16.mxu0 %v460
  %615 = vmatmul.mubr.bf16.gmra.mrb[0].mxu0 %v301
  %v616 = vpop.f32.mrb[0].mxu0
  %v617 = vadd.f32 0.0, %v616
  %v618 = vpop.f32.mrb[0].mxu0
  %v619 = vpop.f32.mrb[0].mxu0
  %v620 = vadd.f32 0.0, %v619
  %v621 = vpop.f32.mrb[0].mxu0
  %622 = vmatprep.mubr.bf16.mxu0 %v463
  %623 = vmatmul.mubr.bf16.gmra.mrb[0].mxu0 %v303
  %v624 = vpop.f32.mrb[0].mxu0
  %v625 = vadd.f32 0.0, %v624
  %v626 = vpop.f32.mrb[0].mxu0
  %v627 = vpop.f32.mrb[0].mxu0
  %v628 = vadd.f32 0.0, %v627
  %v629 = vpop.f32.mrb[0].mxu0
  %630 = vmatprep.mubr.bf16.mxu0 %v466
  %631 = vmatmul.mubr.bf16.gmra.mrb[0].mxu0 %v305
  %v632 = vpop.f32.mrb[0].mxu0
  %v633 = vadd.f32 0.0, %v632
  %v634 = vpop.f32.mrb[0].mxu0
  %v635 = vpop.f32.mrb[0].mxu0
  %v636 = vadd.f32 0.0, %v635
  %v637 = vpop.f32.mrb[0].mxu0
  %638 = vmatprep.mubr.bf16.mxu0 %v469
  %639 = vmatmul.mubr.bf16.gmra.mrb[0].mxu0 %v307
  %v640 = vpop.f32.mrb[0].mxu0
  %v641 = vadd.f32 0.0, %v640
  %v642 = vpop.f32.mrb[0].mxu0
  %v643 = vpop.f32.mrb[0].mxu0
  %v644 = vadd.f32 0.0, %v643
  %v645 = vpop.f32.mrb[0].mxu0
  %646 = vmatprep.mubr.bf16.mxu0 %v472
  %647 = vmatmul.mubr.bf16.gmra.mrb[0].mxu0 %v309
  %v648 = vpop.f32.mrb[0].mxu0
  %v649 = vadd.f32 0.0, %v648
  %v650 = vpop.f32.mrb[0].mxu0
  %v651 = vpop.f32.mrb[0].mxu0
  %v652 = vadd.f32 0.0, %v651
  %v653 = vpop.f32.mrb[0].mxu0
  %654 = vmatprep.mubr.bf16.mxu0 %v475
  %655 = vmatmul.mubr.bf16.gmra.mrb[0].mxu0 %v311
  %v656 = vpop.f32.mrb[0].mxu0
  %v657 = vadd.f32 0.0, %v656
  %v658 = vpop.f32.mrb[0].mxu0
  %v659 = vpop.f32.mrb[0].mxu0
  %v660 = vadd.f32 0.0, %v659
  %v661 = vpop.f32.mrb[0].mxu0
  %662 = vmatprep.mubr.bf16.mxu0 %v478
  %663 = vmatmul.mubr.bf16.gmra.mrb[0].mxu0 %v313
  %v664 = vpop.f32.mrb[0].mxu0
  %v665 = vadd.f32 0.0, %v664
  %v666 = vpop.f32.mrb[0].mxu0
  %v667 = vpop.f32.mrb[0].mxu0
  %v668 = vadd.f32 0.0, %v667
  %v669 = vpop.f32.mrb[0].mxu0
  %670 = vmatprep.mubr.bf16.mxu0 %v481
  %671 = vmatmul.mubr.bf16.gmra.mrb[0].mxu0 %v315
  %v672 = vpop.f32.mrb[0].mxu0
  %v673 = vadd.f32 0.0, %v672
  %v674 = vpop.f32.mrb[0].mxu0
  %v675 = vpop.f32.mrb[0].mxu0
  %v676 = vadd.f32 0.0, %v675
  %v677 = vpop.f32.mrb[0].mxu0
  %678 = vmatprep.mubr.bf16.mxu0 %v484
  %679 = vmatmul.mubr.bf16.gmra.mrb[0].mxu0 %v317
  %v680 = vpop.f32.mrb[0].mxu0
  %v681 = vadd.f32 0.0, %v680
  %v682 = vpop.f32.mrb[0].mxu0
  %v683 = vpop.f32.mrb[0].mxu0
  %v684 = vadd.f32 0.0, %v683
  %v685 = vpop.f32.mrb[0].mxu0
  %686 = vmatprep.mubr.bf16.mxu0 %v487
  %687 = vmatmul.mubr.bf16.gmra.mrb[0].mxu0 %v319
  %v688 = vpop.f32.mrb[0].mxu0
  %v689 = vadd.f32 0.0, %v688
  %v690 = vpop.f32.mrb[0].mxu0
  %v691 = vpop.f32.mrb[0].mxu0
  %v692 = vadd.f32 0.0, %v691
  %v693 = vpop.f32.mrb[0].mxu0
  %694 = vmatprep.mubr.bf16.mxu0 %v490
  %695 = vmatmul.mubr.bf16.gmra.mrb[0].mxu0 %v321
  %v696 = vpop.f32.mrb[0].mxu0
  %v697 = vadd.f32 0.0, %v696
  %v698 = vpop.f32.mrb[0].mxu0
  %v699 = vpop.f32.mrb[0].mxu0
  %v700 = vadd.f32 0.0, %v699
  %v701 = vpop.f32.mrb[0].mxu0
  %702 = vmatprep.mubr.bf16.mxu0 %v493
  %703 = vmatmul.mubr.bf16.gmra.mrb[0].mxu0 %v323
  %v704 = vpop.f32.mrb[0].mxu0
  %v705 = vadd.f32 0.0, %v704
  %v706 = vpop.f32.mrb[0].mxu0
  %v707 = vpop.f32.mrb[0].mxu0
  %v708 = vadd.f32 0.0, %v707
  %v709 = vpop.f32.mrb[0].mxu0
  %710 = vmatprep.mubr.bf16.mxu0 %v496
  %711 = vmatmul.mubr.bf16.gmra.mrb[0].mxu0 %v325
  %v712 = vpop.f32.mrb[0].mxu0
  %v713 = vadd.f32 0.0, %v712
  %v714 = vpop.f32.mrb[0].mxu0
  %v715 = vpop.f32.mrb[0].mxu0
  %v716 = vadd.f32 0.0, %v715
  %v717 = vpop.f32.mrb[0].mxu0
  %718 = vmatprep.mubr.bf16.mxu0 %v499
  %719 = vmatmul.mubr.bf16.gmra.mrb[0].mxu0 %v327
  %v720 = vpop.f32.mrb[0].mxu0
  %v721 = vadd.f32 0.0, %v720
  %v722 = vpop.f32.mrb[0].mxu0
  %v723 = vpop.f32.mrb[0].mxu0
  %v724 = vadd.f32 0.0, %v723
  %v725 = vpop.f32.mrb[0].mxu0
  %726 = vmatprep.mubr.bf16.mxu0 %v502
  %727 = vmatmul.mubr.bf16.gmra.mrb[0].mxu0 %v329
  %v728 = vpop.f32.mrb[0].mxu0
  %v729 = vadd.f32 0.0, %v728
  %v730 = vpop.f32.mrb[0].mxu0
  %v731 = vpop.f32.mrb[0].mxu0
  %v732 = vadd.f32 0.0, %v731
  %v733 = vpop.f32.mrb[0].mxu0
  %734 = vmatprep.mubr.bf16.mxu0 %v505
  %735 = vmatmul.mubr.bf16.gmra.mrb[0].mxu0 %v331
  %v736 = vpop.f32.mrb[0].mxu0
  %v737 = vadd.f32 0.0, %v736
  %v738 = vpop.f32.mrb[0].mxu0
  %v739 = vpop.f32.mrb[0].mxu0
  %v740 = vadd.f32 0.0, %v739
  %v741 = vpop.f32.mrb[0].mxu0
  %742 = vmatprep.mubr.bf16.mxu0 %v508
  %743 = vmatmul.mubr.bf16.gmra.mrb[0].mxu0 %v333
  %v744 = vpop.f32.mrb[0].mxu0
  %v745 = vadd.f32 0.0, %v744
  %v746 = vpop.f32.mrb[0].mxu0
  %v747 = vpop.f32.mrb[0].mxu0
  %v748 = vadd.f32 0.0, %v747
  %v749 = vpop.f32.mrb[0].mxu0
  %750 = vmatprep.mubr.bf16.mxu0 %v511
  %751 = vmatmul.mubr.bf16.gmra.mrb[0].mxu0 %v335
  %v752 = vpop.f32.mrb[0].mxu0
  %v753 = vadd.f32 0.0, %v752
  %v754 = vpop.f32.mrb[0].mxu0
  %v755 = vpop.f32.mrb[0].mxu0
  %v756 = vadd.f32 0.0, %v755
  %v757 = vpop.f32.mrb[0].mxu0
  %758 = vmatprep.mubr.bf16.mxu0 %v514
  %759 = vmatmul.mubr.bf16.gmra.mrb[0].mxu0 %v337
  %v760 = vpop.f32.mrb[0].mxu0
  %v761 = vadd.f32 0.0, %v760
  %v762 = vpop.f32.mrb[0].mxu0
  %v763 = vpop.f32.mrb[0].mxu0
  %v764 = vadd.f32 0.0, %v763
  %v765 = vpop.f32.mrb[0].mxu0
  %766 = vmatprep.mubr.bf16.mxu0 %v517
  %767 = vmatmul.mubr.bf16.gmra.mrb[0].mxu0 %v339
  %v768 = vpop.f32.mrb[0].mxu0
  %v769 = vadd.f32 0.0, %v768
  %v770 = vpop.f32.mrb[0].mxu0
  %v771 = vpop.f32.mrb[0].mxu0
  %v772 = vadd.f32 0.0, %v771
  %v773 = vpop.f32.mrb[0].mxu0
  %774 = vmatprep.mubr.bf16.mxu0 %v520
  %775 = vmatmul.mubr.bf16.gmra.mrb[0].mxu0 %v341
  %v776 = vpop.f32.mrb[0].mxu0
  %v777 = vadd.f32 0.0, %v776
  %v778 = vpop.f32.mrb[0].mxu0
  %v779 = vpop.f32.mrb[0].mxu0
  %v780 = vadd.f32 0.0, %v779
  %v781 = vpop.f32.mrb[0].mxu0
  %782 = vmatprep.mubr.bf16.mxu0 %v523
  %783 = vmatmul.mubr.bf16.gmra.mrb[0].mxu0 %v343
  %v784 = vpop.f32.mrb[0].mxu0
  %v785 = vadd.f32 0.0, %v784
  %v786 = vpop.f32.mrb[0].mxu0
  %v787 = vpop.f32.mrb[0].mxu0
  %v788 = vadd.f32 0.0, %v787
  %v789 = vpop.f32.mrb[0].mxu0
  %790 = vmatprep.mubr.bf16.mxu0 %v526
  %791 = vmatmul.mubr.bf16.gmra.mrb[0].mxu0 %v345
  %v792 = vpop.f32.mrb[0].mxu0
  %v793 = vadd.f32 0.0, %v792
  %v794 = vpop.f32.mrb[0].mxu0
  %v795 = vpop.f32.mrb[0].mxu0
  %v796 = vadd.f32 0.0, %v795
  %v797 = vpop.f32.mrb[0].mxu0
  %798 = vmatprep.mubr.bf16.mxu0 %v529
  %799 = vmatmul.mubr.bf16.gmra.mrb[0].mxu0 %v347
  %v800 = vpop.f32.mrb[0].mxu0
  %v801 = vadd.f32 0.0, %v800
  %v802 = vpop.f32.mrb[0].mxu0
  %v803 = vpop.f32.mrb[0].mxu0
  %v804 = vadd.f32 0.0, %v803
  %v805 = vpop.f32.mrb[0].mxu0
  %806 = vmatprep.mubr.bf16.mxu0 %v532
  %807 = vmatmul.mubr.bf16.gmra.mrb[0].mxu0 %v349
  %v808 = vpop.f32.mrb[0].mxu0
  %v809 = vadd.f32 0.0, %v808
  %v810 = vpop.f32.mrb[0].mxu0
  %v811 = vpop.f32.mrb[0].mxu0
  %v812 = vadd.f32 0.0, %v811
  %v813 = vpop.f32.mrb[0].mxu0
  %814 = vmatprep.mubr.bf16.mxu0 %v535
  %815 = vmatmul.mubr.bf16.gmra.mrb[0].mxu0 %v351
  %v816 = vpop.f32.mrb[0].mxu0
  %v817 = vadd.f32 0.0, %v816
  %v818 = vpop.f32.mrb[0].mxu0
  %v819 = vpop.f32.mrb[0].mxu0
  %v820 = vadd.f32 0.0, %v819
  %v821 = vpop.f32.mrb[0].mxu0
  %822 = vmatprep.mubr.bf16.mxu0 %v538
  %823 = vmatmul.mubr.bf16.gmra.mrb[0].mxu0 %v353
  %v824 = vpop.f32.mrb[0].mxu0
  %v825 = vadd.f32 0.0, %v824
  %v826 = vpop.f32.mrb[0].mxu0
  %v827 = vpop.f32.mrb[0].mxu0
  %v828 = vadd.f32 0.0, %v827
  %v829 = vpop.f32.mrb[0].mxu0
  %830 = vmatprep.mubr.bf16.mxu0 %v541
  %831 = vmatmul.mubr.bf16.gmra.mrb[0].mxu0 %v355
  %v832 = vpop.f32.mrb[0].mxu0
  %v833 = vadd.f32 0.0, %v832
  %v834 = vpop.f32.mrb[0].mxu0
  %v835 = vpop.f32.mrb[0].mxu0
  %v836 = vadd.f32 0.0, %v835
  %v837 = vpop.f32.mrb[0].mxu0
  %838 = vdwg.mxu0
  %v839 = vld [vmem:[%s2] sm:$0x1]
  %v841 = vlaneseq
  %v842 = vshrl.u32 %v841, 7
  %v843 = vsub.s32 0, %v842
  %v844 = vrot.slane %v839, %v843
  %v846 = vmul.f32 %v585, %v844
  %v847 = vmul.f32 %v588, %v844
  %v848 = vmul.f32 %v593, %v844
  %v849 = vmul.f32 %v596, %v844
  %v850 = vmul.f32 %v601, %v844
  %v851 = vmul.f32 %v604, %v844
  %v852 = vmul.f32 %v609, %v844
  %v853 = vmul.f32 %v612, %v844
  %v854 = vmul.f32 %v617, %v844
  %v855 = vmul.f32 %v620, %v844
  %v856 = vmul.f32 %v625, %v844
  %v857 = vmul.f32 %v628, %v844
  %v858 = vmul.f32 %v633, %v844
  %v859 = vmul.f32 %v636, %v844
  %v860 = vmul.f32 %v641, %v844
  %v861 = vmul.f32 %v644, %v844
  %v862 = vmul.f32 %v649, %v844
  %v863 = vmul.f32 %v652, %v844
  %v864 = vmul.f32 %v657, %v844
  %v865 = vmul.f32 %v660, %v844
  %v866 = vmul.f32 %v665, %v844
  %v867 = vmul.f32 %v668, %v844
  %v868 = vmul.f32 %v673, %v844
  %v869 = vmul.f32 %v676, %v844
  %v870 = vmul.f32 %v681, %v844
  %v871 = vmul.f32 %v684, %v844
  %v872 = vmul.f32 %v689, %v844
  %v873 = vmul.f32 %v692, %v844
  %v874 = vmul.f32 %v697, %v844
  %v875 = vmul.f32 %v700, %v844
  %v876 = vmul.f32 %v705, %v844
  %v877 = vmul.f32 %v708, %v844
  %v878 = vmul.f32 %v713, %v844
  %v879 = vmul.f32 %v716, %v844
  %v880 = vmul.f32 %v721, %v844
  %v881 = vmul.f32 %v724, %v844
  %v882 = vmul.f32 %v729, %v844
  %v883 = vmul.f32 %v732, %v844
  %v884 = vmul.f32 %v737, %v844
  %v885 = vmul.f32 %v740, %v844
  %v886 = vmul.f32 %v745, %v844
  %v887 = vmul.f32 %v748, %v844
  %v888 = vmul.f32 %v753, %v844
  %v889 = vmul.f32 %v756, %v844
  %v890 = vmul.f32 %v761, %v844
  %v891 = vmul.f32 %v764, %v844
  %v892 = vmul.f32 %v769, %v844
  %v893 = vmul.f32 %v772, %v844
  %v894 = vmul.f32 %v777, %v844
  %v895 = vmul.f32 %v780, %v844
  %v896 = vmul.f32 %v785, %v844
  %v897 = vmul.f32 %v788, %v844
  %v898 = vmul.f32 %v793, %v844
  %v899 = vmul.f32 %v796, %v844
  %v900 = vmul.f32 %v801, %v844
  %v901 = vmul.f32 %v804, %v844
  %v902 = vmul.f32 %v809, %v844
  %v903 = vmul.f32 %v812, %v844
  %v904 = vmul.f32 %v817, %v844
  %v905 = vmul.f32 %v820, %v844
  %v906 = vmul.f32 %v825, %v844
  %v907 = vmul.f32 %v828, %v844
  %v908 = vmul.f32 %v833, %v844
  %v909 = vmul.f32 %v836, %v844
  %v910 = vld [vmem:[%s3] sm:$0x1]
  %v912 = vlaneseq
  %v913 = vshrl.u32 %v912, 7
  %v914 = vsub.s32 0, %v913
  %v915 = vrot.slane %v910, %v914
  %v917 = vadd.f32 %v846, %v915
  %v918 = vadd.f32 %v847, %v915
  %v919 = vadd.f32 %v848, %v915
  %v920 = vadd.f32 %v849, %v915
  %v921 = vadd.f32 %v850, %v915
  %v922 = vadd.f32 %v851, %v915
  %v923 = vadd.f32 %v852, %v915
  %v924 = vadd.f32 %v853, %v915
  %v925 = vadd.f32 %v854, %v915
  %v926 = vadd.f32 %v855, %v915
  %v927 = vadd.f32 %v856, %v915
  %v928 = vadd.f32 %v857, %v915
  %v929 = vadd.f32 %v858, %v915
  %v930 = vadd.f32 %v859, %v915
  %v931 = vadd.f32 %v860, %v915
  %v932 = vadd.f32 %v861, %v915
  %v933 = vadd.f32 %v862, %v915
  %v934 = vadd.f32 %v863, %v915
  %v935 = vadd.f32 %v864, %v915
  %v936 = vadd.f32 %v865, %v915
  %v937 = vadd.f32 %v866, %v915
  %v938 = vadd.f32 %v867, %v915
  %v939 = vadd.f32 %v868, %v915
  %v940 = vadd.f32 %v869, %v915
  %v941 = vadd.f32 %v870, %v915
  %v942 = vadd.f32 %v871, %v915
  %v943 = vadd.f32 %v872, %v915
  %v944 = vadd.f32 %v873, %v915
  %v945 = vadd.f32 %v874, %v915
  %v946 = vadd.f32 %v875, %v915
  %v947 = vadd.f32 %v876, %v915
  %v948 = vadd.f32 %v877, %v915
  %v949 = vadd.f32 %v878, %v915
  %v950 = vadd.f32 %v879, %v915
  %v951 = vadd.f32 %v880, %v915
  %v952 = vadd.f32 %v881, %v915
  %v953 = vadd.f32 %v882, %v915
  %v954 = vadd.f32 %v883, %v915
  %v955 = vadd.f32 %v884, %v915
  %v956 = vadd.f32 %v885, %v915
  %v957 = vadd.f32 %v886, %v915
  %v958 = vadd.f32 %v887, %v915
  %v959 = vadd.f32 %v888, %v915
  %v960 = vadd.f32 %v889, %v915
  %v961 = vadd.f32 %v890, %v915
  %v962 = vadd.f32 %v891, %v915
  %v963 = vadd.f32 %v892, %v915
  %v964 = vadd.f32 %v893, %v915
  %v965 = vadd.f32 %v894, %v915
  %v966 = vadd.f32 %v895, %v915
  %v967 = vadd.f32 %v896, %v915
  %v968 = vadd.f32 %v897, %v915
  %v969 = vadd.f32 %v898, %v915
  %v970 = vadd.f32 %v899, %v915
  %v971 = vadd.f32 %v900, %v915
  %v972 = vadd.f32 %v901, %v915
  %v973 = vadd.f32 %v902, %v915
  %v974 = vadd.f32 %v903, %v915
  %v975 = vadd.f32 %v904, %v915
  %v976 = vadd.f32 %v905, %v915
  %v977 = vadd.f32 %v906, %v915
  %v978 = vadd.f32 %v907, %v915
  %v979 = vadd.f32 %v908, %v915
  %v980 = vadd.f32 %v909, %v915
  %v981 = vmax.f32 %v917, 0.0
  %v982 = vmax.f32 %v918, 0.0
  %v983 = vmax.f32 %v919, 0.0
  %v984 = vmax.f32 %v920, 0.0
  %v985 = vmax.f32 %v921, 0.0
  %v986 = vmax.f32 %v922, 0.0
  %v987 = vmax.f32 %v923, 0.0
  %v988 = vmax.f32 %v924, 0.0
  %v989 = vmax.f32 %v925, 0.0
  %v990 = vmax.f32 %v926, 0.0
  %v991 = vmax.f32 %v927, 0.0
  %v992 = vmax.f32 %v928, 0.0
  %v993 = vmax.f32 %v929, 0.0
  %v994 = vmax.f32 %v930, 0.0
  %v995 = vmax.f32 %v931, 0.0
  %v996 = vmax.f32 %v932, 0.0
  %v997 = vmax.f32 %v933, 0.0
  %v998 = vmax.f32 %v934, 0.0
  %v999 = vmax.f32 %v935, 0.0
  %v1000 = vmax.f32 %v936, 0.0
  %v1001 = vmax.f32 %v937, 0.0
  %v1002 = vmax.f32 %v938, 0.0
  %v1003 = vmax.f32 %v939, 0.0
  %v1004 = vmax.f32 %v940, 0.0
  %v1005 = vmax.f32 %v941, 0.0
  %v1006 = vmax.f32 %v942, 0.0
  %v1007 = vmax.f32 %v943, 0.0
  %v1008 = vmax.f32 %v944, 0.0
  %v1009 = vmax.f32 %v945, 0.0
  %v1010 = vmax.f32 %v946, 0.0
  %v1011 = vmax.f32 %v947, 0.0
  %v1012 = vmax.f32 %v948, 0.0
  %v1013 = vmax.f32 %v949, 0.0
  %v1014 = vmax.f32 %v950, 0.0
  %v1015 = vmax.f32 %v951, 0.0
  %v1016 = vmax.f32 %v952, 0.0
  %v1017 = vmax.f32 %v953, 0.0
  %v1018 = vmax.f32 %v954, 0.0
  %v1019 = vmax.f32 %v955, 0.0
  %v1020 = vmax.f32 %v956, 0.0
  %v1021 = vmax.f32 %v957, 0.0
  %v1022 = vmax.f32 %v958, 0.0
  %v1023 = vmax.f32 %v959, 0.0
  %v1024 = vmax.f32 %v960, 0.0
  %v1025 = vmax.f32 %v961, 0.0
  %v1026 = vmax.f32 %v962, 0.0
  %v1027 = vmax.f32 %v963, 0.0
  %v1028 = vmax.f32 %v964, 0.0
  %v1029 = vmax.f32 %v965, 0.0
  %v1030 = vmax.f32 %v966, 0.0
  %v1031 = vmax.f32 %v967, 0.0
  %v1032 = vmax.f32 %v968, 0.0
  %v1033 = vmax.f32 %v969, 0.0
  %v1034 = vmax.f32 %v970, 0.0
  %v1035 = vmax.f32 %v971, 0.0
  %v1036 = vmax.f32 %v972, 0.0
  %v1037 = vmax.f32 %v973, 0.0
  %v1038 = vmax.f32 %v974, 0.0
  %v1039 = vmax.f32 %v975, 0.0
  %v1040 = vmax.f32 %v976, 0.0
  %v1041 = vmax.f32 %v977, 0.0
  %v1042 = vmax.f32 %v978, 0.0
  %v1043 = vmax.f32 %v979, 0.0
  %v1044 = vmax.f32 %v980, 0.0
  %v1045 = vpack.c.bf16 %v982, %v981
  %v1046 = vpack.c.bf16 %v984, %v983
  %v1047 = vpack.c.bf16 %v986, %v985
  %v1048 = vpack.c.bf16 %v988, %v987
  %v1049 = vpack.c.bf16 %v990, %v989
  %v1050 = vpack.c.bf16 %v992, %v991
  %v1051 = vpack.c.bf16 %v994, %v993
  %v1052 = vpack.c.bf16 %v996, %v995
  %v1053 = vpack.c.bf16 %v998, %v997
  %v1054 = vpack.c.bf16 %v1000, %v999
  %v1055 = vpack.c.bf16 %v1002, %v1001
  %v1056 = vpack.c.bf16 %v1004, %v1003
  %v1057 = vpack.c.bf16 %v1006, %v1005
  %v1058 = vpack.c.bf16 %v1008, %v1007
  %v1059 = vpack.c.bf16 %v1010, %v1009
  %v1060 = vpack.c.bf16 %v1012, %v1011
  %v1061 = vpack.c.bf16 %v1014, %v1013
  %v1062 = vpack.c.bf16 %v1016, %v1015
  %v1063 = vpack.c.bf16 %v1018, %v1017
  %v1064 = vpack.c.bf16 %v1020, %v1019
  %v1065 = vpack.c.bf16 %v1022, %v1021
  %v1066 = vpack.c.bf16 %v1024, %v1023
  %v1067 = vpack.c.bf16 %v1026, %v1025
  %v1068 = vpack.c.bf16 %v1028, %v1027
  %v1069 = vpack.c.bf16 %v1030, %v1029
  %v1070 = vpack.c.bf16 %v1032, %v1031
  %v1071 = vpack.c.bf16 %v1034, %v1033
  %v1072 = vpack.c.bf16 %v1036, %v1035
  %v1073 = vpack.c.bf16 %v1038, %v1037
  %v1074 = vpack.c.bf16 %v1040, %v1039
  %v1075 = vpack.c.bf16 %v1042, %v1041
  %v1076 = vpack.c.bf16 %v1044, %v1043
  %v1109 = vunpack.c.l.b16 %v1045
  %v1110 = vunpack.c.h.b16 %v1045
  %v1111 = vunpack.c.l.b16 %v1046
  %v1112 = vunpack.c.h.b16 %v1046
  %v1113 = vunpack.c.l.b16 %v1047
  %v1114 = vunpack.c.h.b16 %v1047
  %v1115 = vunpack.c.l.b16 %v1048
  %v1116 = vunpack.c.h.b16 %v1048
  %v1117 = vunpack.c.l.b16 %v1049
  %v1118 = vunpack.c.h.b16 %v1049
  %v1119 = vunpack.c.l.b16 %v1050
  %v1120 = vunpack.c.h.b16 %v1050
  %v1121 = vunpack.c.l.b16 %v1051
  %v1122 = vunpack.c.h.b16 %v1051
  %v1123 = vunpack.c.l.b16 %v1052
  %v1124 = vunpack.c.h.b16 %v1052
  %v1125 = vunpack.c.l.b16 %v1053
  %v1126 = vunpack.c.h.b16 %v1053
  %v1127 = vunpack.c.l.b16 %v1054
  %v1128 = vunpack.c.h.b16 %v1054
  %v1129 = vunpack.c.l.b16 %v1055
  %v1130 = vunpack.c.h.b16 %v1055
  %v1131 = vunpack.c.l.b16 %v1056
  %v1132 = vunpack.c.h.b16 %v1056
  %v1133 = vunpack.c.l.b16 %v1057
  %v1134 = vunpack.c.h.b16 %v1057
  %v1135 = vunpack.c.l.b16 %v1058
  %v1136 = vunpack.c.h.b16 %v1058
  %v1137 = vunpack.c.l.b16 %v1059
  %v1138 = vunpack.c.h.b16 %v1059
  %v1139 = vunpack.c.l.b16 %v1060
  %v1140 = vunpack.c.h.b16 %v1060
  %v1141 = vunpack.c.l.b16 %v1061
  %v1142 = vunpack.c.h.b16 %v1061
  %v1143 = vunpack.c.l.b16 %v1062
  %v1144 = vunpack.c.h.b16 %v1062
  %v1145 = vunpack.c.l.b16 %v1063
  %v1146 = vunpack.c.h.b16 %v1063
  %v1147 = vunpack.c.l.b16 %v1064
  %v1148 = vunpack.c.h.b16 %v1064
  %v1149 = vunpack.c.l.b16 %v1065
  %v1150 = vunpack.c.h.b16 %v1065
  %v1151 = vunpack.c.l.b16 %v1066
  %v1152 = vunpack.c.h.b16 %v1066
  %v1153 = vunpack.c.l.b16 %v1067
  %v1154 = vunpack.c.h.b16 %v1067
  %v1155 = vunpack.c.l.b16 %v1068
  %v1156 = vunpack.c.h.b16 %v1068
  %v1157 = vunpack.c.l.b16 %v1069
  %v1158 = vunpack.c.h.b16 %v1069
  %v1159 = vunpack.c.l.b16 %v1070
  %v1160 = vunpack.c.h.b16 %v1070
  %v1161 = vunpack.c.l.b16 %v1071
  %v1162 = vunpack.c.h.b16 %v1071
  %v1163 = vunpack.c.l.b16 %v1072
  %v1164 = vunpack.c.h.b16 %v1072
  %v1165 = vunpack.c.l.b16 %v1073
  %v1166 = vunpack.c.h.b16 %v1073
  %v1167 = vunpack.c.l.b16 %v1074
  %v1168 = vunpack.c.h.b16 %v1074
  %v1169 = vunpack.c.l.b16 %v1075
  %v1170 = vunpack.c.h.b16 %v1075
  %v1171 = vunpack.c.l.b16 %v1076
  %v1172 = vunpack.c.h.b16 %v1076
  %v1173 = vpack.c.b16 %v1109, %v1109
  %v1174 = vpack.c.b16 %v1110, %v1110
  %v1175 = vpack.c.b16 %v1111, %v1111
  %v1176 = vpack.c.b16 %v1112, %v1112
  %v1177 = vpack.c.b16 %v1113, %v1113
  %v1178 = vpack.c.b16 %v1114, %v1114
  %v1179 = vpack.c.b16 %v1115, %v1115
  %v1180 = vpack.c.b16 %v1116, %v1116
  %v1181 = vpack.c.b16 %v1117, %v1117
  %v1182 = vpack.c.b16 %v1118, %v1118
  %v1183 = vpack.c.b16 %v1119, %v1119
  %v1184 = vpack.c.b16 %v1120, %v1120
  %v1185 = vpack.c.b16 %v1121, %v1121
  %v1186 = vpack.c.b16 %v1122, %v1122
  %v1187 = vpack.c.b16 %v1123, %v1123
  %v1188 = vpack.c.b16 %v1124, %v1124
  %v1189 = vpack.c.b16 %v1125, %v1125
  %v1190 = vpack.c.b16 %v1126, %v1126
  %v1191 = vpack.c.b16 %v1127, %v1127
  %v1192 = vpack.c.b16 %v1128, %v1128
  %v1193 = vpack.c.b16 %v1129, %v1129
  %v1194 = vpack.c.b16 %v1130, %v1130
  %v1195 = vpack.c.b16 %v1131, %v1131
  %v1196 = vpack.c.b16 %v1132, %v1132
  %v1197 = vpack.c.b16 %v1133, %v1133
  %v1198 = vpack.c.b16 %v1134, %v1134
  %v1199 = vpack.c.b16 %v1135, %v1135
  %v1200 = vpack.c.b16 %v1136, %v1136
  %v1201 = vpack.c.b16 %v1137, %v1137
  %v1202 = vpack.c.b16 %v1138, %v1138
  %v1203 = vpack.c.b16 %v1139, %v1139
  %v1204 = vpack.c.b16 %v1140, %v1140
  %v1205 = vpack.c.b16 %v1141, %v1141
  %v1206 = vpack.c.b16 %v1142, %v1142
  %v1207 = vpack.c.b16 %v1143, %v1143
  %v1208 = vpack.c.b16 %v1144, %v1144
  %v1209 = vpack.c.b16 %v1145, %v1145
  %v1210 = vpack.c.b16 %v1146, %v1146
  %v1211 = vpack.c.b16 %v1147, %v1147
  %v1212 = vpack.c.b16 %v1148, %v1148
  %v1213 = vpack.c.b16 %v1149, %v1149
  %v1214 = vpack.c.b16 %v1150, %v1150
  %v1215 = vpack.c.b16 %v1151, %v1151
  %v1216 = vpack.c.b16 %v1152, %v1152
  %v1217 = vpack.c.b16 %v1153, %v1153
  %v1218 = vpack.c.b16 %v1154, %v1154
  %v1219 = vpack.c.b16 %v1155, %v1155
  %v1220 = vpack.c.b16 %v1156, %v1156
  %v1221 = vpack.c.b16 %v1157, %v1157
  %v1222 = vpack.c.b16 %v1158, %v1158
  %v1223 = vpack.c.b16 %v1159, %v1159
  %v1224 = vpack.c.b16 %v1160, %v1160
  %v1225 = vpack.c.b16 %v1161, %v1161
  %v1226 = vpack.c.b16 %v1162, %v1162
  %v1227 = vpack.c.b16 %v1163, %v1163
  %v1228 = vpack.c.b16 %v1164, %v1164
  %v1229 = vpack.c.b16 %v1165, %v1165
  %v1230 = vpack.c.b16 %v1166, %v1166
  %v1231 = vpack.c.b16 %v1167, %v1167
  %v1232 = vpack.c.b16 %v1168, %v1168
  %v1233 = vpack.c.b16 %v1169, %v1169
  %v1234 = vpack.c.b16 %v1170, %v1170
  %v1235 = vpack.c.b16 %v1171, %v1171
  %v1236 = vpack.c.b16 %v1172, %v1172
  %vm1301 = vcmask 519168
  %1302 = vst.msk [vmem:[%s4] sm:$0xf] %vm1301, %v1173
  %1303 = vst.msk [vmem:[%s4 + $0x4] sm:$0xf] %vm1301, %v1174
  %1304 = vst.msk [vmem:[%s4 + $0x8] sm:$0xf] %vm1301, %v1175
  %1305 = vst.msk [vmem:[%s4 + $0xc] sm:$0xf] %vm1301, %v1176
  %1306 = vst.msk [vmem:[%s4 + $0x10] sm:$0xf] %vm1301, %v1177
  %1307 = vst.msk [vmem:[%s4 + $0x14] sm:$0xf] %vm1301, %v1178
  %1308 = vst.msk [vmem:[%s4 + $0x18] sm:$0xf] %vm1301, %v1179
  %1309 = vst.msk [vmem:[%s4 + $0x1c] sm:$0xf] %vm1301, %v1180
  %1310 = vst.msk [vmem:[%s4 + $0x20] sm:$0xf] %vm1301, %v1181
  %1311 = vst.msk [vmem:[%s4 + $0x24] sm:$0xf] %vm1301, %v1182
  %1312 = vst.msk [vmem:[%s4 + $0x28] sm:$0xf] %vm1301, %v1183
  %1313 = vst.msk [vmem:[%s4 + $0x2c] sm:$0xf] %vm1301, %v1184
  %1314 = vst.msk [vmem:[%s4 + $0x30] sm:$0xf] %vm1301, %v1185
  %1315 = vst.msk [vmem:[%s4 + $0x34] sm:$0xf] %vm1301, %v1186
  %1316 = vst.msk [vmem:[%s4 + $0x38] sm:$0xf] %vm1301, %v1187
  %1317 = vst.msk [vmem:[%s4 + $0x3c] sm:$0xf] %vm1301, %v1188
  %1318 = vst.msk [vmem:[%s4 + $0x40] sm:$0xf] %vm1301, %v1189
  %1319 = vst.msk [vmem:[%s4 + $0x44] sm:$0xf] %vm1301, %v1190
  %1320 = vst.msk [vmem:[%s4 + $0x48] sm:$0xf] %vm1301, %v1191
  %1321 = vst.msk [vmem:[%s4 + $0x4c] sm:$0xf] %vm1301, %v1192
  %1322 = vst.msk [vmem:[%s4 + $0x50] sm:$0xf] %vm1301, %v1193
  %1323 = vst.msk [vmem:[%s4 + $0x54] sm:$0xf] %vm1301, %v1194
  %1324 = vst.msk [vmem:[%s4 + $0x58] sm:$0xf] %vm1301, %v1195
  %1325 = vst.msk [vmem:[%s4 + $0x5c] sm:$0xf] %vm1301, %v1196
  %1326 = vst.msk [vmem:[%s4 + $0x60] sm:$0xf] %vm1301, %v1197
  %1327 = vst.msk [vmem:[%s4 + $0x64] sm:$0xf] %vm1301, %v1198
  %1328 = vst.msk [vmem:[%s4 + $0x68] sm:$0xf] %vm1301, %v1199
  %1329 = vst.msk [vmem:[%s4 + $0x6c] sm:$0xf] %vm1301, %v1200
  %1330 = vst.msk [vmem:[%s4 + $0x70] sm:$0xf] %vm1301, %v1201
  %1331 = vst.msk [vmem:[%s4 + $0x74] sm:$0xf] %vm1301, %v1202
  %1332 = vst.msk [vmem:[%s4 + $0x78] sm:$0xf] %vm1301, %v1203
  %1333 = vst.msk [vmem:[%s4 + $0x7c] sm:$0xf] %vm1301, %v1204
  %1334 = vst.msk [vmem:[%s4 + $0x80] sm:$0xf] %vm1301, %v1205
  %1335 = vst.msk [vmem:[%s4 + $0x84] sm:$0xf] %vm1301, %v1206
  %1336 = vst.msk [vmem:[%s4 + $0x88] sm:$0xf] %vm1301, %v1207
  %1337 = vst.msk [vmem:[%s4 + $0x8c] sm:$0xf] %vm1301, %v1208
  %1338 = vst.msk [vmem:[%s4 + $0x90] sm:$0xf] %vm1301, %v1209
  %1339 = vst.msk [vmem:[%s4 + $0x94] sm:$0xf] %vm1301, %v1210
  %1340 = vst.msk [vmem:[%s4 + $0x98] sm:$0xf] %vm1301, %v1211
  %1341 = vst.msk [vmem:[%s4 + $0x9c] sm:$0xf] %vm1301, %v1212
  %1342 = vst.msk [vmem:[%s4 + $0xa0] sm:$0xf] %vm1301, %v1213
  %1343 = vst.msk [vmem:[%s4 + $0xa4] sm:$0xf] %vm1301, %v1214
  %1344 = vst.msk [vmem:[%s4 + $0xa8] sm:$0xf] %vm1301, %v1215
  %1345 = vst.msk [vmem:[%s4 + $0xac] sm:$0xf] %vm1301, %v1216
  %1346 = vst.msk [vmem:[%s4 + $0xb0] sm:$0xf] %vm1301, %v1217
  %1347 = vst.msk [vmem:[%s4 + $0xb4] sm:$0xf] %vm1301, %v1218
  %1348 = vst.msk [vmem:[%s4 + $0xb8] sm:$0xf] %vm1301, %v1219
  %1349 = vst.msk [vmem:[%s4 + $0xbc] sm:$0xf] %vm1301, %v1220
  %1350 = vst.msk [vmem:[%s4 + $0xc0] sm:$0xf] %vm1301, %v1221
  %1351 = vst.msk [vmem:[%s4 + $0xc4] sm:$0xf] %vm1301, %v1222
  %1352 = vst.msk [vmem:[%s4 + $0xc8] sm:$0xf] %vm1301, %v1223
  %1353 = vst.msk [vmem:[%s4 + $0xcc] sm:$0xf] %vm1301, %v1224
  %1354 = vst.msk [vmem:[%s4 + $0xd0] sm:$0xf] %vm1301, %v1225
  %1355 = vst.msk [vmem:[%s4 + $0xd4] sm:$0xf] %vm1301, %v1226
  %1356 = vst.msk [vmem:[%s4 + $0xd8] sm:$0xf] %vm1301, %v1227
  %1357 = vst.msk [vmem:[%s4 + $0xdc] sm:$0xf] %vm1301, %v1228
  %1358 = vst.msk [vmem:[%s4 + $0xe0] sm:$0xf] %vm1301, %v1229
  %1359 = vst.msk [vmem:[%s4 + $0xe4] sm:$0xf] %vm1301, %v1230
  %1360 = vst.msk [vmem:[%s4 + $0xe8] sm:$0xf] %vm1301, %v1231
  %1361 = vst.msk [vmem:[%s4 + $0xec] sm:$0xf] %vm1301, %v1232
  %1362 = vst.msk [vmem:[%s4 + $0xf0] sm:$0xf] %vm1301, %v1233
  %1363 = vst.msk [vmem:[%s4 + $0xf4] sm:$0xf] %vm1301, %v1234
  %1364 = vst.msk [vmem:[%s4 + $0xf8] sm:$0xf] %vm1301, %v1235
  %1365 = vst.msk [vmem:[%s4 + $0xfc] sm:$0xf] %vm1301, %v1236
  // Predicated region
  $region18: #{fn.1} parent=0 // pred_check
    _
  $region19: #{fn.1} parent=0 // pred_check_branch
    %1367 = sbr.rel (0) target = $region21
  $region20: #{fn.1} parent=0 // pred_region
    _
  $region21: #{fn.1} parent=0 // pred_fallthru
    _
  // Predicated region
  $region22: #{fn.1} parent=0 // pred_check
    _
  $region23: #{fn.1} parent=0 // pred_check_branch
    %1369 = sbr.rel (0) target = $region25
  $region24: #{fn.1} parent=0 // pred_region
    _
  $region25: #{fn.1} parent=0 // pred_fallthru
    _

</llo_original>
